<compile_context>
chip_gen: v7x
topology: tpu7x:2x2x1
jax: 0.10.0
libtpu: 0.0.40
codegen_flags: <defaults>
</compile_context>

<pallas_src>
import jax
import jax.numpy as jnp
from jax.experimental import pallas as pl
from jax.experimental.pallas import tpu as pltpu

MAX_L_TILE = 512            # sequence columns per grid step (multiple of 128 when tiled)
MAX_B_TILE = 8              # max batch elements folded into one grid step
BLOCK_VMEM_BUDGET = 4 << 20 # rough per-step VMEM budget used to pick b_tile


def residual_block_kernel(x_ref, halo_ref, wf_ref, w2_ref, b1_ref, b2s_ref, o_ref):
    # x_ref   : (b_tile, Cin, Lt)    center window of x for this (batch-tile, L-tile)
    # halo_ref: (b_tile, 1, Cin, 2)  [..,0]=x[tile_start-1], [..,1]=x[tile_end] (replicate-clamped)
    # wf_ref  : (2*Cout, 3*Cin)      rows 0:Cout  = [w1_k0 | w1_k1 | w1_k2]
    #                                rows Cout:   = [  0   |  ws   |   0  ]  (shortcut, same MXU pass)
    # w2_ref  : (Cout, Cout)         1x1 conv tail of the left branch
    # b1_ref  : (Cout, 1)            conv1 bias
    # b2s_ref : (Cout, 1)            b2 + bs
    # o_ref   : (b_tile, Cout, Lt)   lane-dense output block
    bt = x_ref.shape[0]
    Lt = x_ref.shape[2]
    Cout = o_ref.shape[1]

    wf = wf_ref[...]
    w2 = w2_ref[...]
    b1 = b1_ref[...]
    b2s = b2s_ref[...]

    # Static (unrolled) loop over batch elements of this tile keeps every op 2D:
    # channels on sublanes, sequence on lanes -> plain MXU dots, lane-dense stores.
    for bi in range(bt):
        xc = x_ref[bi]                      # (Cin, Lt)
        halo = halo_ref[bi, 0]              # (Cin, 2)
        xl = halo[:, 0:1]                   # x[t = tile_start - 1]
        xr = halo[:, 1:2]                   # x[t = tile_end]

        # im2col of the 3 taps along K: one MXU pass instead of three thin ones.
        x_m1 = jnp.concatenate([xl, xc[:, : Lt - 1]], axis=1)   # x[t-1]
        x_p1 = jnp.concatenate([xc[:, 1:], xr], axis=1)         # x[t+1]
        x_stack = jnp.concatenate([x_m1, xc, x_p1], axis=0)     # (3*Cin, Lt)

        fused = jnp.dot(wf, x_stack, preferred_element_type=jnp.float32)   # (2*Cout, Lt)
        h = jnp.maximum(fused[:Cout, :] + b1, 0.0)                          # ReLU(conv1 + b1)
        short = fused[Cout:, :]                                              # shortcut (bias in b2s)

        left = jnp.dot(w2, h, preferred_element_type=jnp.float32)           # 1x1 conv
        o_ref[bi] = jnp.maximum(left + short + b2s, 0.0).astype(o_ref.dtype)


def residual_block(x_ncl, w1, b1, w2, b2, ws=None, bs=None):
    """x_ncl: (N, Cin, L) float32, PyTorch Conv1d layout (kept as-is, no transposes).
       w1: (Cout, Cin, 3), b1: (Cout,), w2: (Cout, Cout, 1), b2: (Cout,),
       ws: (Cout, Cin, 1) or None (identity shortcut when Cin == Cout), bs: (Cout,) or None."""
    N, Cin, L = x_ncl.shape
    Cout = w1.shape[0]

    if ws is None:
        ws_mat = jnp.eye(Cout, Cin, dtype=x_ncl.dtype)   # identity shortcut (Cin == Cout case)
        bs_vec = jnp.zeros((Cout,), dtype=x_ncl.dtype)
    else:
        ws_mat = ws[:, :, 0]
        bs_vec = bs

    # --- sequence tiling (lane-dense blocks) ---
    l_tile = L if L <= MAX_L_TILE else MAX_L_TILE
    n_tiles = pl.cdiv(L, l_tile)
    L_work = n_tiles * l_tile
    x_work = x_ncl if L_work == L else jnp.pad(
        x_ncl, ((0, 0), (0, 0), (0, L_work - L)), mode="edge")

    # --- batch tiling: fold several batch elements per grid step (VMEM-bounded) ---
    per_b_bytes = (Cin + Cout) * l_tile * 4 * 2 + (3 * Cin + 4 * Cout) * l_tile * 4
    b_tile = 1
    for cand in range(min(N, MAX_B_TILE), 0, -1):
        if N % cand == 0 and cand * per_b_bytes <= BLOCK_VMEM_BUDGET:
            b_tile = cand
            break
    n_btiles = N // b_tile

    # Per-tile halo columns with replicate semantics at the global sequence ends only.
    # Tiny gather (2 columns per tile) — replaces a full replicate-pad HBM pass over x.
    starts = jnp.arange(n_tiles) * l_tile
    left_idx = jnp.maximum(starts - 1, 0)
    right_idx = jnp.minimum(starts + l_tile, L_work - 1)
    halo = jnp.stack([jnp.take(x_work, left_idx, axis=2),
                      jnp.take(x_work, right_idx, axis=2)], axis=-1)   # (N, Cin, n_tiles, 2)
    halo = jnp.transpose(halo, (0, 2, 1, 3))                           # (N, n_tiles, Cin, 2)

    # Fused weight: conv1's three taps stacked along K; shortcut appended as extra output rows
    # (center tap only) so it rides the same MXU pass. NCL orientation => PyTorch (out, in)
    # weights need no transpose.
    zeros = jnp.zeros((Cout, Cin), dtype=w1.dtype)
    wf_top = jnp.concatenate([w1[:, :, 0], w1[:, :, 1], w1[:, :, 2]], axis=1)  # (Cout, 3*Cin)
    wf_bot = jnp.concatenate([zeros, ws_mat, zeros], axis=1)                   # (Cout, 3*Cin)
    wf = jnp.concatenate([wf_top, wf_bot], axis=0)                             # (2*Cout, 3*Cin)

    w2_mat = w2[:, :, 0]                     # (Cout, Cout)
    b1_c = b1.reshape(Cout, 1)
    b2s_c = (b2 + bs_vec).reshape(Cout, 1)

    return pl.pallas_call(
        residual_block_kernel,
        out_shape=jax.ShapeDtypeStruct((N, Cout, L), jnp.float32),
        grid_spec=pltpu.PrefetchScalarGridSpec(
            num_scalar_prefetch=0,
            grid=(n_btiles, n_tiles),
            in_specs=[
                pl.BlockSpec((b_tile, Cin, l_tile), lambda n, j: (n, 0, j)),
                pl.BlockSpec((b_tile, 1, Cin, 2), lambda n, j: (n, j, 0, 0)),
                pl.BlockSpec((2 * Cout, 3 * Cin), lambda n, j: (0, 0)),
                pl.BlockSpec((Cout, Cout), lambda n, j: (0, 0)),
                pl.BlockSpec((Cout, 1), lambda n, j: (0, 0)),
                pl.BlockSpec((Cout, 1), lambda n, j: (0, 0)),
            ],
            out_specs=pl.BlockSpec((b_tile, Cout, l_tile), lambda n, j: (n, 0, j)),
        ),
        compiler_params=pltpu.CompilerParams(
            dimension_semantics=("parallel", "parallel"),
            vmem_limit_bytes=32 * 1024 * 1024,   # safe on v5e/v6e/v7x; leaves v7x headroom
        ),
    )(x_work, halo, wf, w2_mat, b1_c, b2s_c)


def reference(x_ncl, w1, b1, w2, b2, ws, bs):
    # Pure-JAX reference matching the PyTorch module semantics.
    x_nlc = jnp.transpose(x_ncl, (0, 2, 1))
    xpad = jnp.pad(x_nlc, ((0, 0), (1, 1), (0, 0)), mode="edge")
    L = x_ncl.shape[2]
    acc = b1[None, None, :]
    for k in range(3):
        acc = acc + jnp.einsum("nlc,co->nlo", xpad[:, k:k + L, :], w1[:, :, k].T)
    h = jnp.maximum(acc, 0.0)
    left = jnp.einsum("nlc,co->nlo", h, w2[:, :, 0].T) + b2[None, None, :]
    short = jnp.einsum("nlc,co->nlo", x_nlc, ws[:, :, 0].T) + bs[None, None, :]
    out = jnp.maximum(left + short, 0.0)
    return jnp.transpose(out, (0, 2, 1))


if __name__ == "__main__":
    key = jax.random.PRNGKey(0)
    N, Cin, Cout, L = 2, 4, 8, 16
    ks = jax.random.split(key, 7)
    x = jax.random.normal(ks[0], (N, Cin, L), dtype=jnp.float32)
    w1 = jax.random.normal(ks[1], (Cout, Cin, 3), dtype=jnp.float32) * 0.2
    b1 = jax.random.normal(ks[2], (Cout,), dtype=jnp.float32) * 0.1
    w2 = jax.random.normal(ks[3], (Cout, Cout, 1), dtype=jnp.float32) * 0.2
    b2 = jax.random.normal(ks[4], (Cout,), dtype=jnp.float32) * 0.1
    ws = jax.random.normal(ks[5], (Cout, Cin, 1), dtype=jnp.float32) * 0.2
    bs = jax.random.normal(ks[6], (Cout,), dtype=jnp.float32) * 0.1

    out = residual_block(x, w1, b1, w2, b2, ws, bs)
    jax.block_until_ready(out)

    ref = reference(x, w1, b1, w2, b2, ws, bs)
    assert out.shape == (N, Cout, L)
    assert jnp.allclose(out, ref, atol=1e-5, rtol=1e-5), float(jnp.max(jnp.abs(out - ref)))
    print("KERNEL_OK")
</pallas_src>

<mosaic_0001>
module attributes {stable_mosaic.version = 11 : i64} {
  func.func @residual_block_kernel(%arg0: i32, %arg1: i32, %arg2: memref<2x4x16xf32, #tpu.memory_space<vmem>>, %arg3: memref<2x1x4x2xf32, #tpu.memory_space<vmem>>, %arg4: memref<16x12xf32, #tpu.memory_space<vmem>>, %arg5: memref<8x8xf32, #tpu.memory_space<vmem>>, %arg6: memref<8x1xf32, #tpu.memory_space<vmem>>, %arg7: memref<8x1xf32, #tpu.memory_space<vmem>>, %arg8: memref<2x8x16xf32, #tpu.memory_space<vmem>>) attributes {dimension_semantics = [#tpu.dimension_semantics<parallel>, #tpu.dimension_semantics<parallel>], iteration_bounds = array<i64: 1, 1>, scalar_prefetch = 0 : i64, scratch_operands = 0 : i64, tpu.core_type = #tpu.core_type<tc>, window_params = [{transform_indices = @transform_0, window_bounds = array<i64: 2, 4, 16>}, {transform_indices = @transform_1, window_bounds = array<i64: 2, 1, 4, 2>}, {pipeline_mode = #tpu.pipeline_mode<synchronous>, transform_indices = @transform_2, window_bounds = array<i64: 16, 12>}, {pipeline_mode = #tpu.pipeline_mode<synchronous>, transform_indices = @transform_3, window_bounds = array<i64: 8, 8>}, {pipeline_mode = #tpu.pipeline_mode<synchronous>, transform_indices = @transform_4, window_bounds = array<i64: 8, 1>}, {pipeline_mode = #tpu.pipeline_mode<synchronous>, transform_indices = @transform_5, window_bounds = array<i64: 8, 1>}, {transform_indices = @transform_6, window_bounds = array<i64: 2, 8, 16>}]} {
    %c0 = arith.constant 0 : index
    %c0_0 = arith.constant 0 : index
    %0 = vector.load %arg4[%c0, %c0_0] : memref<16x12xf32, #tpu.memory_space<vmem>>, vector<16x12xf32>
    %c0_1 = arith.constant 0 : index
    %c0_2 = arith.constant 0 : index
    %1 = vector.load %arg5[%c0_1, %c0_2] : memref<8x8xf32, #tpu.memory_space<vmem>>, vector<8x8xf32>
    %c0_3 = arith.constant 0 : index
    %c0_4 = arith.constant 0 : index
    %2 = vector.load %arg6[%c0_3, %c0_4] : memref<8x1xf32, #tpu.memory_space<vmem>>, vector<8x1xf32>
    %c0_5 = arith.constant 0 : index
    %c0_6 = arith.constant 0 : index
    %3 = vector.load %arg7[%c0_5, %c0_6] : memref<8x1xf32, #tpu.memory_space<vmem>>, vector<8x1xf32>
    %c0_7 = arith.constant 0 : index
    %c0_8 = arith.constant 0 : index
    %c0_9 = arith.constant 0 : index
    %4 = vector.load %arg2[%c0_7, %c0_8, %c0_9] : memref<2x4x16xf32, #tpu.memory_space<vmem>>, vector<1x4x16xf32>
    %5 = vector.shape_cast %4 : vector<1x4x16xf32> to vector<4x16xf32>
    %c0_10 = arith.constant 0 : index
    %c0_11 = arith.constant 0 : index
    %c0_12 = arith.constant 0 : index
    %c0_13 = arith.constant 0 : index
    %6 = vector.load %arg3[%c0_10, %c0_11, %c0_12, %c0_13] : memref<2x1x4x2xf32, #tpu.memory_space<vmem>>, vector<1x1x4x2xf32>
    %7 = vector.shape_cast %6 : vector<1x1x4x2xf32> to vector<4x2xf32>
    %8 = vector.extract_strided_slice %7 {offsets = [0, 0], sizes = [4, 1], strides = [1, 1]} : vector<4x2xf32> to vector<4x1xf32>
    %9 = vector.extract_strided_slice %7 {offsets = [0, 1], sizes = [4, 1], strides = [1, 1]} : vector<4x2xf32> to vector<4x1xf32>
    %10 = vector.extract_strided_slice %5 {offsets = [0, 0], sizes = [4, 15], strides = [1, 1]} : vector<4x16xf32> to vector<4x15xf32>
    %11 = tpu.concatenate %8, %10 in 1 : vector<4x1xf32>, vector<4x15xf32> -> vector<4x16xf32>
    %12 = vector.extract_strided_slice %5 {offsets = [0, 1], sizes = [4, 15], strides = [1, 1]} : vector<4x16xf32> to vector<4x15xf32>
    %13 = tpu.concatenate %12, %9 in 1 : vector<4x15xf32>, vector<4x1xf32> -> vector<4x16xf32>
    %14 = tpu.concatenate %11, %5, %13 in 0 : vector<4x16xf32>, vector<4x16xf32>, vector<4x16xf32> -> vector<12x16xf32>
    %cst = arith.constant dense<0.000000e+00> : vector<16x16xf32>
    %15 = tpu.matmul %0, %14, %cst {dimension_numbers = #tpu.dot_dimension_numbers<[1], [0], [0], [1], [0, 0, 1, 1], [], []>} : vector<16x12xf32>, vector<12x16xf32>, vector<16x16xf32> -> vector<16x16xf32>
    %16 = vector.extract_strided_slice %15 {offsets = [0, 0], sizes = [8, 16], strides = [1, 1]} : vector<16x16xf32> to vector<8x16xf32>
    %17 = vector.broadcast %2 : vector<8x1xf32> to vector<8x16xf32>
    %18 = arith.addf %16, %17 : vector<8x16xf32>
    %cst_14 = arith.constant 0.000000e+00 : f32
    %19 = vector.broadcast %cst_14 : f32 to vector<8x16xf32>
    %20 = arith.maximumf %18, %19 : vector<8x16xf32>
    %21 = vector.extract_strided_slice %15 {offsets = [8, 0], sizes = [8, 16], strides = [1, 1]} : vector<16x16xf32> to vector<8x16xf32>
    %cst_15 = arith.constant dense<0.000000e+00> : vector<8x16xf32>
    %22 = tpu.matmul %1, %20, %cst_15 {dimension_numbers = #tpu.dot_dimension_numbers<[1], [0], [0], [1], [0, 0, 1, 1], [], []>} : vector<8x8xf32>, vector<8x16xf32>, vector<8x16xf32> -> vector<8x16xf32>
    %23 = arith.addf %22, %21 : vector<8x16xf32>
    %24 = vector.broadcast %3 : vector<8x1xf32> to vector<8x16xf32>
    %25 = arith.addf %23, %24 : vector<8x16xf32>
    %cst_16 = arith.constant 0.000000e+00 : f32
    %26 = vector.broadcast %cst_16 : f32 to vector<8x16xf32>
    %27 = arith.maximumf %25, %26 : vector<8x16xf32>
    %c0_17 = arith.constant 0 : index
    %c0_18 = arith.constant 0 : index
    %c0_19 = arith.constant 0 : index
    %28 = vector.load %arg8[%c0_17, %c0_18, %c0_19] : memref<2x8x16xf32, #tpu.memory_space<vmem>>, vector<1x8x16xf32>
    %29 = vector.shape_cast %28 : vector<1x8x16xf32> to vector<8x16xf32>
    %30 = vector.shape_cast %27 : vector<8x16xf32> to vector<1x8x16xf32>
    tpu.vector_store %arg8[%c0_17, %c0_18, %c0_19], %30 {strides = array<i32>} : memref<2x8x16xf32, #tpu.memory_space<vmem>>, vector<1x8x16xf32>,
    %c1 = arith.constant 1 : index
    %c0_20 = arith.constant 0 : index
    %c0_21 = arith.constant 0 : index
    %31 = vector.load %arg2[%c1, %c0_20, %c0_21] : memref<2x4x16xf32, #tpu.memory_space<vmem>>, vector<1x4x16xf32>
    %32 = vector.shape_cast %31 : vector<1x4x16xf32> to vector<4x16xf32>
    %c1_22 = arith.constant 1 : index
    %c0_23 = arith.constant 0 : index
    %c0_24 = arith.constant 0 : index
    %c0_25 = arith.constant 0 : index
    %33 = vector.load %arg3[%c1_22, %c0_23, %c0_24, %c0_25] : memref<2x1x4x2xf32, #tpu.memory_space<vmem>>, vector<1x1x4x2xf32>
    %34 = vector.shape_cast %33 : vector<1x1x4x2xf32> to vector<4x2xf32>
    %35 = vector.extract_strided_slice %34 {offsets = [0, 0], sizes = [4, 1], strides = [1, 1]} : vector<4x2xf32> to vector<4x1xf32>
    %36 = vector.extract_strided_slice %34 {offsets = [0, 1], sizes = [4, 1], strides = [1, 1]} : vector<4x2xf32> to vector<4x1xf32>
    %37 = vector.extract_strided_slice %32 {offsets = [0, 0], sizes = [4, 15], strides = [1, 1]} : vector<4x16xf32> to vector<4x15xf32>
    %38 = tpu.concatenate %35, %37 in 1 : vector<4x1xf32>, vector<4x15xf32> -> vector<4x16xf32>
    %39 = vector.extract_strided_slice %32 {offsets = [0, 1], sizes = [4, 15], strides = [1, 1]} : vector<4x16xf32> to vector<4x15xf32>
    %40 = tpu.concatenate %39, %36 in 1 : vector<4x15xf32>, vector<4x1xf32> -> vector<4x16xf32>
    %41 = tpu.concatenate %38, %32, %40 in 0 : vector<4x16xf32>, vector<4x16xf32>, vector<4x16xf32> -> vector<12x16xf32>
    %cst_26 = arith.constant dense<0.000000e+00> : vector<16x16xf32>
    %42 = tpu.matmul %0, %41, %cst_26 {dimension_numbers = #tpu.dot_dimension_numbers<[1], [0], [0], [1], [0, 0, 1, 1], [], []>} : vector<16x12xf32>, vector<12x16xf32>, vector<16x16xf32> -> vector<16x16xf32>
    %43 = vector.extract_strided_slice %42 {offsets = [0, 0], sizes = [8, 16], strides = [1, 1]} : vector<16x16xf32> to vector<8x16xf32>
    %44 = vector.broadcast %2 : vector<8x1xf32> to vector<8x16xf32>
    %45 = arith.addf %43, %44 : vector<8x16xf32>
    %cst_27 = arith.constant 0.000000e+00 : f32
    %46 = vector.broadcast %cst_27 : f32 to vector<8x16xf32>
    %47 = arith.maximumf %45, %46 : vector<8x16xf32>
    %48 = vector.extract_strided_slice %42 {offsets = [8, 0], sizes = [8, 16], strides = [1, 1]} : vector<16x16xf32> to vector<8x16xf32>
    %cst_28 = arith.constant dense<0.000000e+00> : vector<8x16xf32>
    %49 = tpu.matmul %1, %47, %cst_28 {dimension_numbers = #tpu.dot_dimension_numbers<[1], [0], [0], [1], [0, 0, 1, 1], [], []>} : vector<8x8xf32>, vector<8x16xf32>, vector<8x16xf32> -> vector<8x16xf32>
    %50 = arith.addf %49, %48 : vector<8x16xf32>
    %51 = vector.broadcast %3 : vector<8x1xf32> to vector<8x16xf32>
    %52 = arith.addf %50, %51 : vector<8x16xf32>
    %cst_29 = arith.constant 0.000000e+00 : f32
    %53 = vector.broadcast %cst_29 : f32 to vector<8x16xf32>
    %54 = arith.maximumf %52, %53 : vector<8x16xf32>
    %c1_30 = arith.constant 1 : index
    %c0_31 = arith.constant 0 : index
    %c0_32 = arith.constant 0 : index
    %55 = vector.load %arg8[%c1_30, %c0_31, %c0_32] : memref<2x8x16xf32, #tpu.memory_space<vmem>>, vector<1x8x16xf32>
    %56 = vector.shape_cast %55 : vector<1x8x16xf32> to vector<8x16xf32>
    %57 = vector.shape_cast %54 : vector<8x16xf32> to vector<1x8x16xf32>
    tpu.vector_store %arg8[%c1_30, %c0_31, %c0_32], %57 {strides = array<i32>} : memref<2x8x16xf32, #tpu.memory_space<vmem>>, vector<1x8x16xf32>,
    return
  }
  func.func @transform_0(%arg0: i32, %arg1: i32) -> (i32, i32, i32) {
    %c0_i32 = arith.constant 0 : i32
    %c0_i32_0 = arith.constant 0 : i32
    return %arg0, %c0_i32, %arg1 : i32, i32, i32
  }
  func.func @transform_1(%arg0: i32, %arg1: i32) -> (i32, i32, i32, i32) {
    %c0_i32 = arith.constant 0 : i32
    %c0_i32_0 = arith.constant 0 : i32
    %c0_i32_1 = arith.constant 0 : i32
    return %arg0, %arg1, %c0_i32, %c0_i32_0 : i32, i32, i32, i32
  }
  func.func @transform_2(%arg0: i32, %arg1: i32) -> (i32, i32) {
    %c0_i32 = arith.constant 0 : i32
    %c0_i32_0 = arith.constant 0 : i32
    %c0_i32_1 = arith.constant 0 : i32
    return %c0_i32, %c0_i32_0 : i32, i32
  }
  func.func @transform_3(%arg0: i32, %arg1: i32) -> (i32, i32) {
    %c0_i32 = arith.constant 0 : i32
    %c0_i32_0 = arith.constant 0 : i32
    %c0_i32_1 = arith.constant 0 : i32
    return %c0_i32, %c0_i32_0 : i32, i32
  }
  func.func @transform_4(%arg0: i32, %arg1: i32) -> (i32, i32) {
    %c0_i32 = arith.constant 0 : i32
    %c0_i32_0 = arith.constant 0 : i32
    %c0_i32_1 = arith.constant 0 : i32
    return %c0_i32, %c0_i32_0 : i32, i32
  }
  func.func @transform_5(%arg0: i32, %arg1: i32) -> (i32, i32) {
    %c0_i32 = arith.constant 0 : i32
    %c0_i32_0 = arith.constant 0 : i32
    %c0_i32_1 = arith.constant 0 : i32
    return %c0_i32, %c0_i32_0 : i32, i32
  }
  func.func @transform_6(%arg0: i32, %arg1: i32) -> (i32, i32, i32) {
    %c0_i32 = arith.constant 0 : i32
    %c0_i32_0 = arith.constant 0 : i32
    return %arg0, %c0_i32, %arg1 : i32, i32, i32
  }
}

</mosaic_0001>

<llo_original>
// kernel: tpu_custom_call.1
$region0: #{tpu_custom_call.1}
  #allocation0 [shape = 'u32[]', space=smem, size = 0x4, offset = 0x4, fixed_abs, tag = 'smem constant byte address 0x4 - core index']
  #allocation1 [shape = 'u32[144,128]{1,0:T(1,128)}', space=vmem, size = 0x12000, scoped, tag = 'internal scratch']
  %s0 = inlined_call_operand.vmem [shape: f32[2,4,16], index: 0, kind: input, shape index: {}]
  %s1 = inlined_call_operand.vmem [shape: f32[2,1,4,2], index: 1, kind: input, shape index: {}]
  %s2 = inlined_call_operand.vmem [shape: f32[16,12], index: 2, kind: input, shape index: {}]
  %s3 = inlined_call_operand.vmem [shape: f32[8,8], index: 3, kind: input, shape index: {}]
  %s4 = inlined_call_operand.vmem [shape: f32[8,1], index: 4, kind: input, shape index: {}]
  %s5 = inlined_call_operand.vmem [shape: f32[8,1], index: 5, kind: input, shape index: {}]
  %s6 = inlined_call_operand.hbm [shape: f32[2,8,16], index: 6, kind: output, shape index: {}]
  %s7 = sld [smem:[#allocation0]]
  $region34: #{tpu_custom_call.1} parent=0
    _
  %s9 = ssub.s32 1, %s7
  %s10 = scalar_select 0, %s9, %s7
  $region1: #{tpu_custom_call.1} parent=0
    #allocation2 [shape = 'u8[8192]{0}', space=vmem, size = 0x2000, scoped, tag = 'output window, operand 0, single buffered']
    #allocation3 [shape = 's32[1]{0}', space=sflag, size = 0x4, scoped, tag = 'scoped memory for tpu_custom_call.1']
    %11 = vsyncpa [#allocation3], 0
    // Predicated region
    $region2: #{tpu_custom_call.1} parent=1 // pred_check
      _
    $region3: #{tpu_custom_call.1} parent=1 // pred_check_branch
      %13 = sbr.rel (0) target = $region5
    $region4: #{tpu_custom_call.1} parent=1 // pred_region
      _
    $region5: #{tpu_custom_call.1} parent=1 // pred_fallthru
      _
    // Predicated region
    $region6: #{tpu_custom_call.1} parent=1 // pred_check
      _
    $region7: #{tpu_custom_call.1} parent=1 // pred_check_branch
      %15 = sbr.rel (0) target = $region9
    $region8: #{tpu_custom_call.1} parent=1 // pred_region
      _
    $region9: #{tpu_custom_call.1} parent=1 // pred_fallthru
      _
    // Predicated region
    $region10: #{tpu_custom_call.1} parent=1 // pred_check
      _
    $region11: #{tpu_custom_call.1} parent=1 // pred_check_branch
      %17 = sbr.rel (0) target = $region13
    $region12: #{tpu_custom_call.1} parent=1 // pred_region
      _
    $region13: #{tpu_custom_call.1} parent=1 // pred_fallthru
      _
    // Predicated region
    $region14: #{tpu_custom_call.1} parent=1 // pred_check
      _
    $region15: #{tpu_custom_call.1} parent=1 // pred_check_branch
      %19 = sbr.rel (0) target = $region17
    $region16: #{tpu_custom_call.1} parent=1 // pred_region
      _
    $region17: #{tpu_custom_call.1} parent=1 // pred_fallthru
      _
    // Predicated region
    $region18: #{tpu_custom_call.1} parent=1 // pred_check
      _
    $region19: #{tpu_custom_call.1} parent=1 // pred_check_branch
      %21 = sbr.rel (0) target = $region21
    $region20: #{tpu_custom_call.1} parent=1 // pred_region
      _
    $region21: #{tpu_custom_call.1} parent=1 // pred_fallthru
      _
    // Predicated region
    $region22: #{tpu_custom_call.1} parent=1 // pred_check
      _
    $region23: #{tpu_custom_call.1} parent=1 // pred_check_branch
      %23 = sbr.rel (0) target = $region25
    $region24: #{tpu_custom_call.1} parent=1 // pred_region
      _
    $region25: #{tpu_custom_call.1} parent=1 // pred_fallthru
      _
    %v24 = vld [vmem:[%s2] sm:$0xff]
    %v25 = vld [vmem:[%s2 + $0x8] sm:$0xff]
    %v26 = vld [vmem:[%s3] sm:$0xff]
    %v27 = vld [vmem:[%s4] sm:$0xff]
    %v28 = vld [vmem:[%s5] sm:$0xff]
    %v29 = vld [vmem:[%s0] sm:$0xf]
    %v30 = vld [vmem:[%s1] sm:$0xf]
    %32 = vrot.lane.b32.xlu0 %v29, 1
    %v33 = vpop.permute.xlu0 %32
    %vm35 = vcmask 7168
    %v36 = vsel %vm35, %v30, %v33
    %37 = vrot.lane.b32.xlu0 %v29, 127
    %v38 = vpop.permute.xlu0 %37
    %41 = vrot.lane.b32.xlu0 %v30, 14
    %v42 = vpop.permute.xlu0 %41
    %vm44 = vcmask 121856
    %v45 = vsel %vm44, %v38, %v42
    %v46 = vrot.slane %v29, 4
    %vm48 = vcmask 1043456
    %v49 = vsel %vm48, %v36, %v46
    %vm50 = vcmask 97280
    %v52 = vsel %vm50, %v24, 0
    %v55 = vsel %vm50, %v25, 0
    %v58 = vsel %vm48, %v45, 0
    %60 = vmatprep.subr.mxu0 0.0
    %61 = vmatpush1.msra.mxu0 %v49
    %62 = vmatprep.subr.mxu0 0.0
    %63 = vmatpush1.msra.mxu0 %v58
    %64 = vmatprep.subr.mxu0 0.0
    %65 = vmatpush1.msra.mxu0 0.0
    %66 = vmatprep.subr.mxu0 0.0
    %67 = vmatpush1.msra.mxu0 0.0
    %68 = vmatprep.subr.mxu0 0.0
    %69 = vmatpush1.msra.mxu0 0.0
    %70 = vmatprep.subr.mxu0 0.0
    %71 = vmatpush1.msra.mxu0 0.0
    %72 = vmatprep.subr.mxu0 0.0
    %73 = vmatpush1.msra.mxu0 0.0
    %74 = vmatprep.subr.mxu0 0.0
    %75 = vmatpush1.msra.mxu0 0.0
    %76 = vmatprep.subr.mxu0 0.0
    %77 = vmatpush1.msra.mxu0 0.0
    %78 = vmatprep.subr.mxu0 0.0
    %79 = vmatpush1.msra.mxu0 0.0
    %80 = vmatprep.subr.mxu0 0.0
    %81 = vmatpush1.msra.mxu0 0.0
    %82 = vmatprep.subr.mxu0 0.0
    %83 = vmatpush1.msra.mxu0 0.0
    %84 = vmatprep.subr.mxu0 0.0
    %85 = vmatpush1.msra.mxu0 0.0
    %86 = vmatprep.subr.mxu0 0.0
    %87 = vmatpush1.msra.mxu0 0.0
    %88 = vmatprep.subr.mxu0 0.0
    %89 = vmatpush1.msra.mxu0 0.0
    %90 = vmatprep.subr.mxu0 0.0
    %91 = vmatpush1.msra.mxu0 0.0
    %92 = vmatprep.subr.mxu0 0.0
    %93 = vmatpush1.msra.mxu0 0.0
    %94 = vmatprep.subr.mxu0 0.0
    %95 = vmatpush1.msra.mxu0 0.0
    %96 = vmatprep.subr.mxu0 0.0
    %97 = vmatpush1.msra.mxu0 0.0
    %98 = vmatprep.subr.mxu0 0.0
    %99 = vmatpush1.msra.mxu0 0.0
    %100 = vmatprep.subr.mxu0 0.0
    %101 = vmatpush1.msra.mxu0 0.0
    %102 = vmatprep.subr.mxu0 0.0
    %103 = vmatpush1.msra.mxu0 0.0
    %104 = vmatprep.subr.mxu0 0.0
    %105 = vmatpush1.msra.mxu0 0.0
    %106 = vmatprep.subr.mxu0 0.0
    %107 = vmatpush1.msra.mxu0 0.0
    %108 = vmatprep.subr.mxu0 0.0
    %109 = vmatpush1.msra.mxu0 0.0
    %110 = vmatprep.subr.mxu0 0.0
    %111 = vmatpush1.msra.mxu0 0.0
    %112 = vmatprep.subr.mxu0 0.0
    %113 = vmatpush1.msra.mxu0 0.0
    %114 = vmatprep.subr.mxu0 0.0
    %115 = vmatpush1.msra.mxu0 0.0
    %116 = vmatprep.subr.mxu0 0.0
    %117 = vmatpush1.msra.mxu0 0.0
    %118 = vmatprep.subr.mxu0 0.0
    %119 = vmatpush1.msra.mxu0 0.0
    %120 = vmatprep.subr.mxu0 0.0
    %121 = vmatpush1.msra.mxu0 0.0
    %122 = vmatprep.subr.mxu0 0.0
    %123 = vmatpush1.msra.mxu0 0.0
    %124 = vmatprep.mubr.f32.mxu0 0.0
    %125 = vmatmul.mubr.f32.gmra.mrb[0].mxu0 %v52
    %v126 = vpop.f32.mrb[0].mxu0
    %v127 = vadd.f32 0.0, %v126
    %v128 = vpop.f32.mrb[0].mxu0
    %129 = vmatprep.mubr.f32.mxu0 0.0
    %130 = vmatmul.mubr.f32.gmra.mrb[0].mxu0 %v55
    %v131 = vpop.f32.mrb[0].mxu0
    %v132 = vadd.f32 0.0, %v131
    %v133 = vpop.f32.mrb[0].mxu0
    %134 = vdwg.mxu0
    %136 = vset.pattern.permute.xlu0 0
    %137 = vperm.xlu0 %136, %v27
    %v138 = vpop.permute.xlu0 %137
    %v140 = vadd.f32 %v127, %v138
    %v141 = vmax.f32 %v140, 0.0
    %vm142 = vcmask 64512
    %v144 = vsel %vm142, %v26, 0
    %146 = vmatprep.subr.mxu0 0.0
    %147 = vmatpush1.msra.mxu0 %v141
    %148 = vmatprep.subr.mxu0 0.0
    %149 = vmatpush1.msra.mxu0 0.0
    %150 = vmatprep.subr.mxu0 0.0
    %151 = vmatpush1.msra.mxu0 0.0
    %152 = vmatprep.subr.mxu0 0.0
    %153 = vmatpush1.msra.mxu0 0.0
    %154 = vmatprep.subr.mxu0 0.0
    %155 = vmatpush1.msra.mxu0 0.0
    %156 = vmatprep.subr.mxu0 0.0
    %157 = vmatpush1.msra.mxu0 0.0
    %158 = vmatprep.subr.mxu0 0.0
    %159 = vmatpush1.msra.mxu0 0.0
    %160 = vmatprep.subr.mxu0 0.0
    %161 = vmatpush1.msra.mxu0 0.0
    %162 = vmatprep.subr.mxu0 0.0
    %163 = vmatpush1.msra.mxu0 0.0
    %164 = vmatprep.subr.mxu0 0.0
    %165 = vmatpush1.msra.mxu0 0.0
    %166 = vmatprep.subr.mxu0 0.0
    %167 = vmatpush1.msra.mxu0 0.0
    %168 = vmatprep.subr.mxu0 0.0
    %169 = vmatpush1.msra.mxu0 0.0
    %170 = vmatprep.subr.mxu0 0.0
    %171 = vmatpush1.msra.mxu0 0.0
    %172 = vmatprep.subr.mxu0 0.0
    %173 = vmatpush1.msra.mxu0 0.0
    %174 = vmatprep.subr.mxu0 0.0
    %175 = vmatpush1.msra.mxu0 0.0
    %176 = vmatprep.subr.mxu0 0.0
    %177 = vmatpush1.msra.mxu0 0.0
    %178 = vmatprep.subr.mxu0 0.0
    %179 = vmatpush1.msra.mxu0 0.0
    %180 = vmatprep.subr.mxu0 0.0
    %181 = vmatpush1.msra.mxu0 0.0
    %182 = vmatprep.subr.mxu0 0.0
    %183 = vmatpush1.msra.mxu0 0.0
    %184 = vmatprep.subr.mxu0 0.0
    %185 = vmatpush1.msra.mxu0 0.0
    %186 = vmatprep.subr.mxu0 0.0
    %187 = vmatpush1.msra.mxu0 0.0
    %188 = vmatprep.subr.mxu0 0.0
    %189 = vmatpush1.msra.mxu0 0.0
    %190 = vmatprep.subr.mxu0 0.0
    %191 = vmatpush1.msra.mxu0 0.0
    %192 = vmatprep.subr.mxu0 0.0
    %193 = vmatpush1.msra.mxu0 0.0
    %194 = vmatprep.subr.mxu0 0.0
    %195 = vmatpush1.msra.mxu0 0.0
    %196 = vmatprep.subr.mxu0 0.0
    %197 = vmatpush1.msra.mxu0 0.0
    %198 = vmatprep.subr.mxu0 0.0
    %199 = vmatpush1.msra.mxu0 0.0
    %200 = vmatprep.subr.mxu0 0.0
    %201 = vmatpush1.msra.mxu0 0.0
    %202 = vmatprep.subr.mxu0 0.0
    %203 = vmatpush1.msra.mxu0 0.0
    %204 = vmatprep.subr.mxu0 0.0
    %205 = vmatpush1.msra.mxu0 0.0
    %206 = vmatprep.subr.mxu0 0.0
    %207 = vmatpush1.msra.mxu0 0.0
    %208 = vmatprep.subr.mxu0 0.0
    %209 = vmatpush1.msra.mxu0 0.0
    %210 = vmatprep.mubr.f32.mxu0 0.0
    %211 = vmatmul.mubr.f32.gmra.mrb[0].mxu0 %v144
    %v212 = vpop.f32.mrb[0].mxu0
    %v213 = vadd.f32 %v132, %v212
    %v214 = vpop.f32.mrb[0].mxu0
    %215 = vdwg.mxu0
    %217 = vset.pattern.permute.xlu0 0
    %218 = vperm.xlu0 %217, %v28
    %v219 = vpop.permute.xlu0 %218
    %v221 = vadd.f32 %v213, %v219
    %v222 = vmax.f32 %v221, 0.0
    %vm223 = vcmask 130048
    %224 = vst.msk [vmem:[#allocation2] sm:$0xff] %vm223, %v222
    %s225 = scalar_lea.vmem %s0, 4
    %v226 = vld [vmem:[%s225] sm:$0xf]
    %s227 = scalar_lea.vmem %s1, 4
    %v228 = vld [vmem:[%s227] sm:$0xf]
    %230 = vrot.lane.b32.xlu0 %v226, 1
    %v231 = vpop.permute.xlu0 %230
    %v233 = vsel %vm35, %v228, %v231
    %234 = vrot.lane.b32.xlu0 %v226, 127
    %v235 = vpop.permute.xlu0 %234
    %238 = vrot.lane.b32.xlu0 %v228, 14
    %v239 = vpop.permute.xlu0 %238
    %v241 = vsel %vm44, %v235, %v239
    %v242 = vrot.slane %v226, 4
    %v244 = vsel %vm48, %v233, %v242
    %v246 = vsel %vm48, %v241, 0
    %248 = vmatprep.subr.mxu0 0.0
    %249 = vmatpush1.msra.mxu0 %v244
    %250 = vmatprep.subr.mxu0 0.0
    %251 = vmatpush1.msra.mxu0 %v246
    %252 = vmatprep.subr.mxu0 0.0
    %253 = vmatpush1.msra.mxu0 0.0
    %254 = vmatprep.subr.mxu0 0.0
    %255 = vmatpush1.msra.mxu0 0.0
    %256 = vmatprep.subr.mxu0 0.0
    %257 = vmatpush1.msra.mxu0 0.0
    %258 = vmatprep.subr.mxu0 0.0
    %259 = vmatpush1.msra.mxu0 0.0
    %260 = vmatprep.subr.mxu0 0.0
    %261 = vmatpush1.msra.mxu0 0.0
    %262 = vmatprep.subr.mxu0 0.0
    %263 = vmatpush1.msra.mxu0 0.0
    %264 = vmatprep.subr.mxu0 0.0
    %265 = vmatpush1.msra.mxu0 0.0
    %266 = vmatprep.subr.mxu0 0.0
    %267 = vmatpush1.msra.mxu0 0.0
    %268 = vmatprep.subr.mxu0 0.0
    %269 = vmatpush1.msra.mxu0 0.0
    %270 = vmatprep.subr.mxu0 0.0
    %271 = vmatpush1.msra.mxu0 0.0
    %272 = vmatprep.subr.mxu0 0.0
    %273 = vmatpush1.msra.mxu0 0.0
    %274 = vmatprep.subr.mxu0 0.0
    %275 = vmatpush1.msra.mxu0 0.0
    %276 = vmatprep.subr.mxu0 0.0
    %277 = vmatpush1.msra.mxu0 0.0
    %278 = vmatprep.subr.mxu0 0.0
    %279 = vmatpush1.msra.mxu0 0.0
    %280 = vmatprep.subr.mxu0 0.0
    %281 = vmatpush1.msra.mxu0 0.0
    %282 = vmatprep.subr.mxu0 0.0
    %283 = vmatpush1.msra.mxu0 0.0
    %284 = vmatprep.subr.mxu0 0.0
    %285 = vmatpush1.msra.mxu0 0.0
    %286 = vmatprep.subr.mxu0 0.0
    %287 = vmatpush1.msra.mxu0 0.0
    %288 = vmatprep.subr.mxu0 0.0
    %289 = vmatpush1.msra.mxu0 0.0
    %290 = vmatprep.subr.mxu0 0.0
    %291 = vmatpush1.msra.mxu0 0.0
    %292 = vmatprep.subr.mxu0 0.0
    %293 = vmatpush1.msra.mxu0 0.0
    %294 = vmatprep.subr.mxu0 0.0
    %295 = vmatpush1.msra.mxu0 0.0
    %296 = vmatprep.subr.mxu0 0.0
    %297 = vmatpush1.msra.mxu0 0.0
    %298 = vmatprep.subr.mxu0 0.0
    %299 = vmatpush1.msra.mxu0 0.0
    %300 = vmatprep.subr.mxu0 0.0
    %301 = vmatpush1.msra.mxu0 0.0
    %302 = vmatprep.subr.mxu0 0.0
    %303 = vmatpush1.msra.mxu0 0.0
    %304 = vmatprep.subr.mxu0 0.0
    %305 = vmatpush1.msra.mxu0 0.0
    %306 = vmatprep.subr.mxu0 0.0
    %307 = vmatpush1.msra.mxu0 0.0
    %308 = vmatprep.subr.mxu0 0.0
    %309 = vmatpush1.msra.mxu0 0.0
    %310 = vmatprep.subr.mxu0 0.0
    %311 = vmatpush1.msra.mxu0 0.0
    %312 = vmatprep.mubr.f32.mxu0 0.0
    %313 = vmatmul.mubr.f32.gmra.mrb[0].mxu0 %v52
    %v314 = vpop.f32.mrb[0].mxu0
    %v315 = vadd.f32 0.0, %v314
    %v316 = vpop.f32.mrb[0].mxu0
    %317 = vmatprep.mubr.f32.mxu0 0.0
    %318 = vmatmul.mubr.f32.gmra.mrb[0].mxu0 %v55
    %v319 = vpop.f32.mrb[0].mxu0
    %v320 = vadd.f32 0.0, %v319
    %v321 = vpop.f32.mrb[0].mxu0
    %322 = vdwg.mxu0
    %v323 = vadd.f32 %v315, %v138
    %v324 = vmax.f32 %v323, 0.0
    %325 = vmatprep.subr.mxu0 0.0
    %326 = vmatpush1.msra.mxu0 %v324
    %327 = vmatprep.subr.mxu0 0.0
    %328 = vmatpush1.msra.mxu0 0.0
    %329 = vmatprep.subr.mxu0 0.0
    %330 = vmatpush1.msra.mxu0 0.0
    %331 = vmatprep.subr.mxu0 0.0
    %332 = vmatpush1.msra.mxu0 0.0
    %333 = vmatprep.subr.mxu0 0.0
    %334 = vmatpush1.msra.mxu0 0.0
    %335 = vmatprep.subr.mxu0 0.0
    %336 = vmatpush1.msra.mxu0 0.0
    %337 = vmatprep.subr.mxu0 0.0
    %338 = vmatpush1.msra.mxu0 0.0
    %339 = vmatprep.subr.mxu0 0.0
    %340 = vmatpush1.msra.mxu0 0.0
    %341 = vmatprep.subr.mxu0 0.0
    %342 = vmatpush1.msra.mxu0 0.0
    %343 = vmatprep.subr.mxu0 0.0
    %344 = vmatpush1.msra.mxu0 0.0
    %345 = vmatprep.subr.mxu0 0.0
    %346 = vmatpush1.msra.mxu0 0.0
    %347 = vmatprep.subr.mxu0 0.0
    %348 = vmatpush1.msra.mxu0 0.0
    %349 = vmatprep.subr.mxu0 0.0
    %350 = vmatpush1.msra.mxu0 0.0
    %351 = vmatprep.subr.mxu0 0.0
    %352 = vmatpush1.msra.mxu0 0.0
    %353 = vmatprep.subr.mxu0 0.0
    %354 = vmatpush1.msra.mxu0 0.0
    %355 = vmatprep.subr.mxu0 0.0
    %356 = vmatpush1.msra.mxu0 0.0
    %357 = vmatprep.subr.mxu0 0.0
    %358 = vmatpush1.msra.mxu0 0.0
    %359 = vmatprep.subr.mxu0 0.0
    %360 = vmatpush1.msra.mxu0 0.0
    %361 = vmatprep.subr.mxu0 0.0
    %362 = vmatpush1.msra.mxu0 0.0
    %363 = vmatprep.subr.mxu0 0.0
    %364 = vmatpush1.msra.mxu0 0.0
    %365 = vmatprep.subr.mxu0 0.0
    %366 = vmatpush1.msra.mxu0 0.0
    %367 = vmatprep.subr.mxu0 0.0
    %368 = vmatpush1.msra.mxu0 0.0
    %369 = vmatprep.subr.mxu0 0.0
    %370 = vmatpush1.msra.mxu0 0.0
    %371 = vmatprep.subr.mxu0 0.0
    %372 = vmatpush1.msra.mxu0 0.0
    %373 = vmatprep.subr.mxu0 0.0
    %374 = vmatpush1.msra.mxu0 0.0
    %375 = vmatprep.subr.mxu0 0.0
    %376 = vmatpush1.msra.mxu0 0.0
    %377 = vmatprep.subr.mxu0 0.0
    %378 = vmatpush1.msra.mxu0 0.0
    %379 = vmatprep.subr.mxu0 0.0
    %380 = vmatpush1.msra.mxu0 0.0
    %381 = vmatprep.subr.mxu0 0.0
    %382 = vmatpush1.msra.mxu0 0.0
    %383 = vmatprep.subr.mxu0 0.0
    %384 = vmatpush1.msra.mxu0 0.0
    %385 = vmatprep.subr.mxu0 0.0
    %386 = vmatpush1.msra.mxu0 0.0
    %387 = vmatprep.subr.mxu0 0.0
    %388 = vmatpush1.msra.mxu0 0.0
    %389 = vmatprep.mubr.f32.mxu0 0.0
    %390 = vmatmul.mubr.f32.gmra.mrb[0].mxu0 %v144
    %v391 = vpop.f32.mrb[0].mxu0
    %v392 = vadd.f32 %v320, %v391
    %v393 = vpop.f32.mrb[0].mxu0
    %394 = vdwg.mxu0
    %v395 = vadd.f32 %v392, %v219
    %v396 = vmax.f32 %v395, 0.0
    %s397 = scalar_lea.vmem [#allocation2], 8
    %398 = vst.msk [vmem:[%s397] sm:$0xff] %vm223, %v396
    // Predicated region
    $region26: #{tpu_custom_call.1} parent=1 // pred_check
      _
    $region27: #{tpu_custom_call.1} parent=1 // pred_check_branch
      %400 = sbr.rel (0) target = $region29
    $region28: #{tpu_custom_call.1} parent=1 // pred_region
      %s402 = ssub.s32 256, 256
      %403 = vsyncadd [#allocation3], %s402
      %s404 = sshll.u32 [#allocation2], 4
      %s405 = int_to_ptr.vmem [resolvable:$true] %s404
      %410 = dma.vmem_to_hbm [thread:$0]  %s405, 256, %s6, [#allocation3], 128, 128, 8
    $region29: #{tpu_custom_call.1} parent=1 // pred_fallthru
      _
    // Predicated region
    $region30: #{tpu_custom_call.1} parent=1 // pred_check
      _
    $region31: #{tpu_custom_call.1} parent=1 // pred_check_branch
      %412 = sbr.rel (0) target = $region33
    $region32: #{tpu_custom_call.1} parent=1 // pred_region
      %413 = dma.done [#allocation3], 256
    $region33: #{tpu_custom_call.1} parent=1 // pred_fallthru
      _
    %414 = vsyncpa [#allocation3], 1

</llo_original>
